<compile_context>
chip_gen: v7x
topology: tpu7x:2x2x1
jax: 0.10.0
libtpu: 0.0.40
codegen_flags: <defaults>
</compile_context>

<pallas_src>
import jax
import jax.numpy as jnp
from jax.experimental import pallas as pl
from jax.experimental.pallas import tpu as pltpu


def _linear_pw_kernel(x_ref, w1_ref, w2_ref, bn_ref, o_ref):
    """Single-shot kernel over the flattened (M=5*B, F) slab.

    x_ref  : (M, F)    all branch rows, branch-major
    w1_ref : (F, F)    shared W1 (pre-transposed: x @ w)
    w2_ref : (F, F)    shared W2 (pre-transposed)
    bn_ref : (4, M, F) packed per-row fused BN params: [s1, t1, s2, t2]
                       (biases already folded into t1/t2)
    o_ref  : (M, F)    output rows
    """
    x = x_ref[...]                                               # (M, F)
    s1 = bn_ref[0]
    t1 = bn_ref[1]
    s2 = bn_ref[2]
    t2 = bn_ref[3]

    # Linear 1 (shared p1w1, bias folded) + per-branch BN1 + ReLU
    y = jnp.dot(x, w1_ref[...], preferred_element_type=jnp.float32)
    y = y * s1 + t1
    y = jnp.maximum(y, 0.0)
    # dropout: identity in eval mode

    # Linear 2 (shared p1w2, bias folded) + per-branch BN2 + ReLU
    y = jnp.dot(y, w2_ref[...], preferred_element_type=jnp.float32)
    y = y * s2 + t2
    y = jnp.maximum(y, 0.0)
    # dropout: identity in eval mode

    # residual
    o_ref[...] = (x + y).astype(o_ref.dtype)


@jax.jit
def linear_pw_forward(xs, w1_t, b1, w2_t, b2, bn1_scale, bn1_shift,
                      bn2_scale, bn2_shift):
    """xs: (5, B, F) stacked branch inputs.  Returns (5, B, F)."""
    n_branch, B, F = xs.shape
    M = n_branch * B

    x2d = xs.reshape(M, F)

    # Fold linear biases into the fused-BN shifts (free algebraic fusion):
    #   (x@W + b)*s + t  ==  (x@W)*s + (t + b*s)
    t1 = bn1_shift + b1 * bn1_scale                               # (5, F)
    t2 = bn2_shift + b2 * bn2_scale                               # (5, F)

    # Expand per-branch vectors to per-row and pack into ONE input array.
    def _per_row(v):                                              # (5, F) -> (M, F)
        return jnp.repeat(v, B, axis=0)

    bn_packed = jnp.stack(
        [_per_row(bn1_scale), _per_row(t1), _per_row(bn2_scale), _per_row(t2)]
    )                                                             # (4, M, F)

    grid_spec = pltpu.PrefetchScalarGridSpec(
        num_scalar_prefetch=0,
        grid=(1,),                                                # single invocation
        in_specs=[
            pl.BlockSpec((M, F), lambda i: (0, 0)),               # x slab
            pl.BlockSpec((F, F), lambda i: (0, 0)),               # W1^T (shared)
            pl.BlockSpec((F, F), lambda i: (0, 0)),               # W2^T (shared)
            pl.BlockSpec((4, M, F), lambda i: (0, 0, 0)),         # packed BN params
        ],
        out_specs=pl.BlockSpec((M, F), lambda i: (0, 0)),
    )

    out2d = pl.pallas_call(
        _linear_pw_kernel,
        out_shape=jax.ShapeDtypeStruct((M, F), xs.dtype),
        grid_spec=grid_spec,
        compiler_params=pltpu.CompilerParams(
            dimension_semantics=("arbitrary",)),
    )(x2d, w1_t, w2_t, bn_packed)

    return out2d.reshape(n_branch, B, F)


def make_params(key, linear_size):
    """Deterministic synthetic parameters (matching module __init__ shapes)."""
    F = linear_size
    ks = jax.random.split(key, 16)
    # nn.Linear weight is (out, in); transpose so kernel does x @ W^T as x @ w_t.
    w1 = jax.random.normal(ks[0], (F, F), jnp.float32) * (1.0 / jnp.sqrt(F))
    b1 = jax.random.normal(ks[1], (1, F), jnp.float32) * 0.1
    w2 = jax.random.normal(ks[2], (F, F), jnp.float32) * (1.0 / jnp.sqrt(F))
    b2 = jax.random.normal(ks[3], (1, F), jnp.float32) * 0.1

    eps = 1e-5
    # Per-branch BatchNorm1d params (5 branches x F features), eval mode.
    gamma1 = 1.0 + 0.1 * jax.random.normal(ks[4], (5, F), jnp.float32)
    beta1 = 0.1 * jax.random.normal(ks[5], (5, F), jnp.float32)
    rmean1 = 0.1 * jax.random.normal(ks[6], (5, F), jnp.float32)
    rvar1 = 1.0 + 0.1 * jax.random.uniform(ks[7], (5, F), jnp.float32)
    gamma2 = 1.0 + 0.1 * jax.random.normal(ks[8], (5, F), jnp.float32)
    beta2 = 0.1 * jax.random.normal(ks[9], (5, F), jnp.float32)
    rmean2 = 0.1 * jax.random.normal(ks[10], (5, F), jnp.float32)
    rvar2 = 1.0 + 0.1 * jax.random.uniform(ks[11], (5, F), jnp.float32)

    bn1_scale = gamma1 / jnp.sqrt(rvar1 + eps)
    bn1_shift = beta1 - rmean1 * bn1_scale
    bn2_scale = gamma2 / jnp.sqrt(rvar2 + eps)
    bn2_shift = beta2 - rmean2 * bn2_scale

    return dict(w1_t=w1.T, b1=b1, w2_t=w2.T, b2=b2,
                bn1_scale=bn1_scale, bn1_shift=bn1_shift,
                bn2_scale=bn2_scale, bn2_shift=bn2_shift)


def reference_forward(xs, p):
    """Pure-JAX reference of the (eval-mode) forward for validation."""
    outs = []
    for i in range(xs.shape[0]):
        x = xs[i]
        y = x @ p["w1_t"] + p["b1"]
        y = y * p["bn1_scale"][i] + p["bn1_shift"][i]
        y = jnp.maximum(y, 0.0)
        y = y @ p["w2_t"] + p["b2"]
        y = y * p["bn2_scale"][i] + p["bn2_shift"][i]
        y = jnp.maximum(y, 0.0)
        outs.append(x + y)
    return jnp.stack(outs)


if __name__ == "__main__":
    linear_size = 128   # lane-dense feature dim (multiple of 128)
    batch = 8

    key = jax.random.PRNGKey(0)
    k_param, k_x = jax.random.split(key)
    params = make_params(k_param, linear_size)

    # Five branch inputs x_p1..x_p5, each (batch, linear_size).
    xs = jax.random.normal(k_x, (5, batch, linear_size), jnp.float32)
    x_p1, x_p2, x_p3, x_p4, x_p5 = [xs[i] for i in range(5)]

    out_stack = linear_pw_forward(
        jnp.stack([x_p1, x_p2, x_p3, x_p4, x_p5]),
        params["w1_t"], params["b1"], params["w2_t"], params["b2"],
        params["bn1_scale"], params["bn1_shift"],
        params["bn2_scale"], params["bn2_shift"],
    )
    out_stack = jax.block_until_ready(out_stack)
    out1, out2, out3, out4, out5 = [out_stack[i] for i in range(5)]

    ref = reference_forward(xs, params)
    assert jnp.allclose(out_stack, ref, atol=1e-4, rtol=1e-4), "mismatch vs reference"

    print("KERNEL_OK")
</pallas_src>

<mosaic_0001>
module attributes {stable_mosaic.version = 11 : i64} {
  func.func @_linear_pw_kernel(%arg0: i32, %arg1: memref<40x128xf32, #tpu.memory_space<vmem>>, %arg2: memref<128x128xf32, #tpu.memory_space<vmem>>, %arg3: memref<128x128xf32, #tpu.memory_space<vmem>>, %arg4: memref<4x40x128xf32, #tpu.memory_space<vmem>>, %arg5: memref<40x128xf32, #tpu.memory_space<vmem>>) attributes {dimension_semantics = [#tpu.dimension_semantics<arbitrary>], iteration_bounds = array<i64: 1>, scalar_prefetch = 0 : i64, scratch_operands = 0 : i64, tpu.core_type = #tpu.core_type<tc>, window_params = [{pipeline_mode = #tpu.pipeline_mode<synchronous>, transform_indices = @transform_0, window_bounds = array<i64: 40, 128>}, {pipeline_mode = #tpu.pipeline_mode<synchronous>, transform_indices = @transform_1, window_bounds = array<i64: 128, 128>}, {pipeline_mode = #tpu.pipeline_mode<synchronous>, transform_indices = @transform_2, window_bounds = array<i64: 128, 128>}, {pipeline_mode = #tpu.pipeline_mode<synchronous>, transform_indices = @transform_3, window_bounds = array<i64: 4, 40, 128>}, {pipeline_mode = #tpu.pipeline_mode<synchronous>, transform_indices = @transform_4, window_bounds = array<i64: 40, 128>}]} {
    %c0 = arith.constant 0 : index
    %c0_0 = arith.constant 0 : index
    %0 = vector.load %arg1[%c0, %c0_0] : memref<40x128xf32, #tpu.memory_space<vmem>>, vector<40x128xf32>
    %c0_1 = arith.constant 0 : index
    %c0_2 = arith.constant 0 : index
    %c0_3 = arith.constant 0 : index
    %1 = vector.load %arg4[%c0_1, %c0_2, %c0_3] : memref<4x40x128xf32, #tpu.memory_space<vmem>>, vector<1x40x128xf32>
    %2 = vector.shape_cast %1 : vector<1x40x128xf32> to vector<40x128xf32>
    %c1 = arith.constant 1 : index
    %c0_4 = arith.constant 0 : index
    %c0_5 = arith.constant 0 : index
    %3 = vector.load %arg4[%c1, %c0_4, %c0_5] : memref<4x40x128xf32, #tpu.memory_space<vmem>>, vector<1x40x128xf32>
    %4 = vector.shape_cast %3 : vector<1x40x128xf32> to vector<40x128xf32>
    %c2 = arith.constant 2 : index
    %c0_6 = arith.constant 0 : index
    %c0_7 = arith.constant 0 : index
    %5 = vector.load %arg4[%c2, %c0_6, %c0_7] : memref<4x40x128xf32, #tpu.memory_space<vmem>>, vector<1x40x128xf32>
    %6 = vector.shape_cast %5 : vector<1x40x128xf32> to vector<40x128xf32>
    %c3 = arith.constant 3 : index
    %c0_8 = arith.constant 0 : index
    %c0_9 = arith.constant 0 : index
    %7 = vector.load %arg4[%c3, %c0_8, %c0_9] : memref<4x40x128xf32, #tpu.memory_space<vmem>>, vector<1x40x128xf32>
    %8 = vector.shape_cast %7 : vector<1x40x128xf32> to vector<40x128xf32>
    %c0_10 = arith.constant 0 : index
    %c0_11 = arith.constant 0 : index
    %9 = vector.load %arg2[%c0_10, %c0_11] : memref<128x128xf32, #tpu.memory_space<vmem>>, vector<128x128xf32>
    %cst = arith.constant dense<0.000000e+00> : vector<40x128xf32>
    %10 = tpu.matmul %0, %9, %cst {dimension_numbers = #tpu.dot_dimension_numbers<[1], [0], [0], [1], [0, 0, 1, 1], [], []>} : vector<40x128xf32>, vector<128x128xf32>, vector<40x128xf32> -> vector<40x128xf32>
    %11 = arith.mulf %10, %2 : vector<40x128xf32>
    %12 = arith.addf %11, %4 : vector<40x128xf32>
    %cst_12 = arith.constant 0.000000e+00 : f32
    %13 = vector.broadcast %cst_12 : f32 to vector<40x128xf32>
    %14 = arith.maximumf %12, %13 : vector<40x128xf32>
    %c0_13 = arith.constant 0 : index
    %c0_14 = arith.constant 0 : index
    %15 = vector.load %arg3[%c0_13, %c0_14] : memref<128x128xf32, #tpu.memory_space<vmem>>, vector<128x128xf32>
    %cst_15 = arith.constant dense<0.000000e+00> : vector<40x128xf32>
    %16 = tpu.matmul %14, %15, %cst_15 {dimension_numbers = #tpu.dot_dimension_numbers<[1], [0], [0], [1], [0, 0, 1, 1], [], []>} : vector<40x128xf32>, vector<128x128xf32>, vector<40x128xf32> -> vector<40x128xf32>
    %17 = arith.mulf %16, %6 : vector<40x128xf32>
    %18 = arith.addf %17, %8 : vector<40x128xf32>
    %cst_16 = arith.constant 0.000000e+00 : f32
    %19 = vector.broadcast %cst_16 : f32 to vector<40x128xf32>
    %20 = arith.maximumf %18, %19 : vector<40x128xf32>
    %21 = arith.addf %0, %20 : vector<40x128xf32>
    %c0_17 = arith.constant 0 : index
    %c0_18 = arith.constant 0 : index
    %22 = vector.load %arg5[%c0_17, %c0_18] : memref<40x128xf32, #tpu.memory_space<vmem>>, vector<40x128xf32>
    tpu.vector_store %arg5[%c0_17, %c0_18], %21 {strides = array<i32>} : memref<40x128xf32, #tpu.memory_space<vmem>>, vector<40x128xf32>,
    return
  }
  func.func @transform_0(%arg0: i32) -> (i32, i32) {
    %c0_i32 = arith.constant 0 : i32
    %c0_i32_0 = arith.constant 0 : i32
    %c0_i32_1 = arith.constant 0 : i32
    return %c0_i32, %c0_i32_0 : i32, i32
  }
  func.func @transform_1(%arg0: i32) -> (i32, i32) {
    %c0_i32 = arith.constant 0 : i32
    %c0_i32_0 = arith.constant 0 : i32
    %c0_i32_1 = arith.constant 0 : i32
    return %c0_i32, %c0_i32_0 : i32, i32
  }
  func.func @transform_2(%arg0: i32) -> (i32, i32) {
    %c0_i32 = arith.constant 0 : i32
    %c0_i32_0 = arith.constant 0 : i32
    %c0_i32_1 = arith.constant 0 : i32
    return %c0_i32, %c0_i32_0 : i32, i32
  }
  func.func @transform_3(%arg0: i32) -> (i32, i32, i32) {
    %c0_i32 = arith.constant 0 : i32
    %c0_i32_0 = arith.constant 0 : i32
    %c0_i32_1 = arith.constant 0 : i32
    %c0_i32_2 = arith.constant 0 : i32
    return %c0_i32, %c0_i32_0, %c0_i32_1 : i32, i32, i32
  }
  func.func @transform_4(%arg0: i32) -> (i32, i32) {
    %c0_i32 = arith.constant 0 : i32
    %c0_i32_0 = arith.constant 0 : i32
    %c0_i32_1 = arith.constant 0 : i32
    return %c0_i32, %c0_i32_0 : i32, i32
  }
}

</mosaic_0001>

<llo_original>
// kernel: linear_pw_forward.1
$region0: #{linear_pw_forward.1}
  #allocation0 [shape = 'u32[]', space=smem, size = 0x4, offset = 0x4, fixed_abs, tag = 'smem constant byte address 0x4 - core index']
  #allocation1 [shape = 'u32[144,128]{1,0:T(1,128)}', space=vmem, size = 0x12000, scoped, tag = 'internal scratch']
  %s0 = inlined_call_operand.vmem [shape: f32[40,128], index: 0, kind: input, shape index: {}]
  %s1 = inlined_call_operand.vmem [shape: f32[128,128], index: 1, kind: input, shape index: {}]
  %s2 = inlined_call_operand.vmem [shape: f32[128,128], index: 2, kind: input, shape index: {}]
  %s3 = inlined_call_operand.vmem [shape: f32[4,40,128], index: 3, kind: input, shape index: {}]
  %s4 = inlined_call_operand.hbm [shape: f32[40,128], index: 4, kind: output, shape index: {}]
  %s5 = sld [smem:[#allocation0]]
  $region26: #{linear_pw_forward.1} parent=0
    _
  %s7 = ssub.s32 1, %s5
  %s8 = scalar_select 0, %s7, %s5
  $region1: #{linear_pw_forward.1} parent=0
    #allocation2 [shape = 'u8[20480]{0}', space=vmem, size = 0x5000, scoped, tag = 'output window, operand 0, single buffered']
    #allocation3 [shape = 's32[1]{0}', space=sflag, size = 0x4, scoped, tag = 'scoped memory for linear_pw_forward.1']
    %9 = vsyncpa [#allocation3], 0
    // Predicated region
    $region2: #{linear_pw_forward.1} parent=1 // pred_check
      _
    $region3: #{linear_pw_forward.1} parent=1 // pred_check_branch
      %11 = sbr.rel (0) target = $region5
    $region4: #{linear_pw_forward.1} parent=1 // pred_region
      _
    $region5: #{linear_pw_forward.1} parent=1 // pred_fallthru
      _
    // Predicated region
    $region6: #{linear_pw_forward.1} parent=1 // pred_check
      _
    $region7: #{linear_pw_forward.1} parent=1 // pred_check_branch
      %13 = sbr.rel (0) target = $region9
    $region8: #{linear_pw_forward.1} parent=1 // pred_region
      _
    $region9: #{linear_pw_forward.1} parent=1 // pred_fallthru
      _
    // Predicated region
    $region10: #{linear_pw_forward.1} parent=1 // pred_check
      _
    $region11: #{linear_pw_forward.1} parent=1 // pred_check_branch
      %15 = sbr.rel (0) target = $region13
    $region12: #{linear_pw_forward.1} parent=1 // pred_region
      _
    $region13: #{linear_pw_forward.1} parent=1 // pred_fallthru
      _
    // Predicated region
    $region14: #{linear_pw_forward.1} parent=1 // pred_check
      _
    $region15: #{linear_pw_forward.1} parent=1 // pred_check_branch
      %17 = sbr.rel (0) target = $region17
    $region16: #{linear_pw_forward.1} parent=1 // pred_region
      _
    $region17: #{linear_pw_forward.1} parent=1 // pred_fallthru
      _
    %v18 = vld [vmem:[%s0] sm:$0xff]
    %v19 = vld [vmem:[%s0 + $0x8] sm:$0xff]
    %v20 = vld [vmem:[%s0 + $0x10] sm:$0xff]
    %v21 = vld [vmem:[%s0 + $0x18] sm:$0xff]
    %v22 = vld [vmem:[%s0 + $0x20] sm:$0xff]
    %v23 = vld [vmem:[%s3] sm:$0xff]
    %v24 = vld [vmem:[%s3 + $0x8] sm:$0xff]
    %v25 = vld [vmem:[%s3 + $0x10] sm:$0xff]
    %v26 = vld [vmem:[%s3 + $0x18] sm:$0xff]
    %v27 = vld [vmem:[%s3 + $0x20] sm:$0xff]
    %s28 = scalar_lea.vmem %s3, 40
    %v29 = vld [vmem:[%s28] sm:$0xff]
    %v30 = vld [vmem:[%s28 + $0x8] sm:$0xff]
    %v31 = vld [vmem:[%s28 + $0x10] sm:$0xff]
    %v32 = vld [vmem:[%s28 + $0x18] sm:$0xff]
    %v33 = vld [vmem:[%s28 + $0x20] sm:$0xff]
    %s34 = scalar_lea.vmem %s3, 80
    %v35 = vld [vmem:[%s34] sm:$0xff]
    %v36 = vld [vmem:[%s34 + $0x8] sm:$0xff]
    %v37 = vld [vmem:[%s34 + $0x10] sm:$0xff]
    %v38 = vld [vmem:[%s34 + $0x18] sm:$0xff]
    %v39 = vld [vmem:[%s34 + $0x20] sm:$0xff]
    %s40 = scalar_lea.vmem %s3, 120
    %v41 = vld [vmem:[%s40] sm:$0xff]
    %v42 = vld [vmem:[%s40 + $0x8] sm:$0xff]
    %v43 = vld [vmem:[%s40 + $0x10] sm:$0xff]
    %v44 = vld [vmem:[%s40 + $0x18] sm:$0xff]
    %v45 = vld [vmem:[%s40 + $0x20] sm:$0xff]
    %v46 = vld [vmem:[%s1] sm:$0xff]
    %v47 = vld [vmem:[%s1 + $0x8] sm:$0xff]
    %v48 = vld [vmem:[%s1 + $0x10] sm:$0xff]
    %v49 = vld [vmem:[%s1 + $0x18] sm:$0xff]
    %v50 = vld [vmem:[%s1 + $0x20] sm:$0xff]
    %v51 = vld [vmem:[%s1 + $0x28] sm:$0xff]
    %v52 = vld [vmem:[%s1 + $0x30] sm:$0xff]
    %v53 = vld [vmem:[%s1 + $0x38] sm:$0xff]
    %v54 = vld [vmem:[%s1 + $0x40] sm:$0xff]
    %v55 = vld [vmem:[%s1 + $0x48] sm:$0xff]
    %v56 = vld [vmem:[%s1 + $0x50] sm:$0xff]
    %v57 = vld [vmem:[%s1 + $0x58] sm:$0xff]
    %v58 = vld [vmem:[%s1 + $0x60] sm:$0xff]
    %v59 = vld [vmem:[%s1 + $0x68] sm:$0xff]
    %v60 = vld [vmem:[%s1 + $0x70] sm:$0xff]
    %v61 = vld [vmem:[%s1 + $0x78] sm:$0xff]
    %62 = vmatprep.subr.mxu0 0.0
    %63 = vmatpush1.msra.mxu0 %v46
    %64 = vmatprep.subr.mxu0 0.0
    %65 = vmatpush1.msra.mxu0 %v47
    %66 = vmatprep.subr.mxu0 0.0
    %67 = vmatpush1.msra.mxu0 %v48
    %68 = vmatprep.subr.mxu0 0.0
    %69 = vmatpush1.msra.mxu0 %v49
    %70 = vmatprep.subr.mxu0 0.0
    %71 = vmatpush1.msra.mxu0 %v50
    %72 = vmatprep.subr.mxu0 0.0
    %73 = vmatpush1.msra.mxu0 %v51
    %74 = vmatprep.subr.mxu0 0.0
    %75 = vmatpush1.msra.mxu0 %v52
    %76 = vmatprep.subr.mxu0 0.0
    %77 = vmatpush1.msra.mxu0 %v53
    %78 = vmatprep.subr.mxu0 0.0
    %79 = vmatpush1.msra.mxu0 %v54
    %80 = vmatprep.subr.mxu0 0.0
    %81 = vmatpush1.msra.mxu0 %v55
    %82 = vmatprep.subr.mxu0 0.0
    %83 = vmatpush1.msra.mxu0 %v56
    %84 = vmatprep.subr.mxu0 0.0
    %85 = vmatpush1.msra.mxu0 %v57
    %86 = vmatprep.subr.mxu0 0.0
    %87 = vmatpush1.msra.mxu0 %v58
    %88 = vmatprep.subr.mxu0 0.0
    %89 = vmatpush1.msra.mxu0 %v59
    %90 = vmatprep.subr.mxu0 0.0
    %91 = vmatpush1.msra.mxu0 %v60
    %92 = vmatprep.subr.mxu0 0.0
    %93 = vmatpush1.msra.mxu0 %v61
    %94 = vmatprep.subr.mxu0 0.0
    %95 = vmatpush1.msra.mxu0 0.0
    %96 = vmatprep.subr.mxu0 0.0
    %97 = vmatpush1.msra.mxu0 0.0
    %98 = vmatprep.subr.mxu0 0.0
    %99 = vmatpush1.msra.mxu0 0.0
    %100 = vmatprep.subr.mxu0 0.0
    %101 = vmatpush1.msra.mxu0 0.0
    %102 = vmatprep.subr.mxu0 0.0
    %103 = vmatpush1.msra.mxu0 0.0
    %104 = vmatprep.subr.mxu0 0.0
    %105 = vmatpush1.msra.mxu0 0.0
    %106 = vmatprep.subr.mxu0 0.0
    %107 = vmatpush1.msra.mxu0 0.0
    %108 = vmatprep.subr.mxu0 0.0
    %109 = vmatpush1.msra.mxu0 0.0
    %110 = vmatprep.subr.mxu0 0.0
    %111 = vmatpush1.msra.mxu0 0.0
    %112 = vmatprep.subr.mxu0 0.0
    %113 = vmatpush1.msra.mxu0 0.0
    %114 = vmatprep.subr.mxu0 0.0
    %115 = vmatpush1.msra.mxu0 0.0
    %116 = vmatprep.subr.mxu0 0.0
    %117 = vmatpush1.msra.mxu0 0.0
    %118 = vmatprep.subr.mxu0 0.0
    %119 = vmatpush1.msra.mxu0 0.0
    %120 = vmatprep.subr.mxu0 0.0
    %121 = vmatpush1.msra.mxu0 0.0
    %122 = vmatprep.subr.mxu0 0.0
    %123 = vmatpush1.msra.mxu0 0.0
    %124 = vmatprep.subr.mxu0 0.0
    %125 = vmatpush1.msra.mxu0 0.0
    %126 = vmatprep.mubr.f32.mxu0 0.0
    %127 = vmatmul.mubr.f32.gmra.mrb[0].mxu0 %v18
    %v128 = vpop.f32.mrb[0].mxu0
    %v129 = vadd.f32 0.0, %v128
    %v130 = vpop.f32.mrb[0].mxu0
    %131 = vmatprep.mubr.f32.mxu0 0.0
    %132 = vmatmul.mubr.f32.gmra.mrb[0].mxu0 %v19
    %v133 = vpop.f32.mrb[0].mxu0
    %v134 = vadd.f32 0.0, %v133
    %v135 = vpop.f32.mrb[0].mxu0
    %136 = vmatprep.mubr.f32.mxu0 0.0
    %137 = vmatmul.mubr.f32.gmra.mrb[0].mxu0 %v20
    %v138 = vpop.f32.mrb[0].mxu0
    %v139 = vadd.f32 0.0, %v138
    %v140 = vpop.f32.mrb[0].mxu0
    %141 = vmatprep.mubr.f32.mxu0 0.0
    %142 = vmatmul.mubr.f32.gmra.mrb[0].mxu0 %v21
    %v143 = vpop.f32.mrb[0].mxu0
    %v144 = vadd.f32 0.0, %v143
    %v145 = vpop.f32.mrb[0].mxu0
    %146 = vmatprep.mubr.f32.mxu0 0.0
    %147 = vmatmul.mubr.f32.gmra.mrb[0].mxu0 %v22
    %v148 = vpop.f32.mrb[0].mxu0
    %v149 = vadd.f32 0.0, %v148
    %v150 = vpop.f32.mrb[0].mxu0
    %151 = vdwg.mxu0
    %v152 = vmul.f32 %v129, %v23
    %v153 = vmul.f32 %v134, %v24
    %v154 = vmul.f32 %v139, %v25
    %v155 = vmul.f32 %v144, %v26
    %v156 = vmul.f32 %v149, %v27
    %v157 = vadd.f32 %v152, %v29
    %v158 = vadd.f32 %v153, %v30
    %v159 = vadd.f32 %v154, %v31
    %v160 = vadd.f32 %v155, %v32
    %v161 = vadd.f32 %v156, %v33
    %v162 = vmax.f32 %v157, 0.0
    %v163 = vmax.f32 %v158, 0.0
    %v164 = vmax.f32 %v159, 0.0
    %v165 = vmax.f32 %v160, 0.0
    %v166 = vmax.f32 %v161, 0.0
    %v167 = vld [vmem:[%s2] sm:$0xff]
    %v168 = vld [vmem:[%s2 + $0x8] sm:$0xff]
    %v169 = vld [vmem:[%s2 + $0x10] sm:$0xff]
    %v170 = vld [vmem:[%s2 + $0x18] sm:$0xff]
    %v171 = vld [vmem:[%s2 + $0x20] sm:$0xff]
    %v172 = vld [vmem:[%s2 + $0x28] sm:$0xff]
    %v173 = vld [vmem:[%s2 + $0x30] sm:$0xff]
    %v174 = vld [vmem:[%s2 + $0x38] sm:$0xff]
    %v175 = vld [vmem:[%s2 + $0x40] sm:$0xff]
    %v176 = vld [vmem:[%s2 + $0x48] sm:$0xff]
    %v177 = vld [vmem:[%s2 + $0x50] sm:$0xff]
    %v178 = vld [vmem:[%s2 + $0x58] sm:$0xff]
    %v179 = vld [vmem:[%s2 + $0x60] sm:$0xff]
    %v180 = vld [vmem:[%s2 + $0x68] sm:$0xff]
    %v181 = vld [vmem:[%s2 + $0x70] sm:$0xff]
    %v182 = vld [vmem:[%s2 + $0x78] sm:$0xff]
    %183 = vmatprep.subr.mxu0 0.0
    %184 = vmatpush1.msra.mxu0 %v167
    %185 = vmatprep.subr.mxu0 0.0
    %186 = vmatpush1.msra.mxu0 %v168
    %187 = vmatprep.subr.mxu0 0.0
    %188 = vmatpush1.msra.mxu0 %v169
    %189 = vmatprep.subr.mxu0 0.0
    %190 = vmatpush1.msra.mxu0 %v170
    %191 = vmatprep.subr.mxu0 0.0
    %192 = vmatpush1.msra.mxu0 %v171
    %193 = vmatprep.subr.mxu0 0.0
    %194 = vmatpush1.msra.mxu0 %v172
    %195 = vmatprep.subr.mxu0 0.0
    %196 = vmatpush1.msra.mxu0 %v173
    %197 = vmatprep.subr.mxu0 0.0
    %198 = vmatpush1.msra.mxu0 %v174
    %199 = vmatprep.subr.mxu0 0.0
    %200 = vmatpush1.msra.mxu0 %v175
    %201 = vmatprep.subr.mxu0 0.0
    %202 = vmatpush1.msra.mxu0 %v176
    %203 = vmatprep.subr.mxu0 0.0
    %204 = vmatpush1.msra.mxu0 %v177
    %205 = vmatprep.subr.mxu0 0.0
    %206 = vmatpush1.msra.mxu0 %v178
    %207 = vmatprep.subr.mxu0 0.0
    %208 = vmatpush1.msra.mxu0 %v179
    %209 = vmatprep.subr.mxu0 0.0
    %210 = vmatpush1.msra.mxu0 %v180
    %211 = vmatprep.subr.mxu0 0.0
    %212 = vmatpush1.msra.mxu0 %v181
    %213 = vmatprep.subr.mxu0 0.0
    %214 = vmatpush1.msra.mxu0 %v182
    %215 = vmatprep.subr.mxu0 0.0
    %216 = vmatpush1.msra.mxu0 0.0
    %217 = vmatprep.subr.mxu0 0.0
    %218 = vmatpush1.msra.mxu0 0.0
    %219 = vmatprep.subr.mxu0 0.0
    %220 = vmatpush1.msra.mxu0 0.0
    %221 = vmatprep.subr.mxu0 0.0
    %222 = vmatpush1.msra.mxu0 0.0
    %223 = vmatprep.subr.mxu0 0.0
    %224 = vmatpush1.msra.mxu0 0.0
    %225 = vmatprep.subr.mxu0 0.0
    %226 = vmatpush1.msra.mxu0 0.0
    %227 = vmatprep.subr.mxu0 0.0
    %228 = vmatpush1.msra.mxu0 0.0
    %229 = vmatprep.subr.mxu0 0.0
    %230 = vmatpush1.msra.mxu0 0.0
    %231 = vmatprep.subr.mxu0 0.0
    %232 = vmatpush1.msra.mxu0 0.0
    %233 = vmatprep.subr.mxu0 0.0
    %234 = vmatpush1.msra.mxu0 0.0
    %235 = vmatprep.subr.mxu0 0.0
    %236 = vmatpush1.msra.mxu0 0.0
    %237 = vmatprep.subr.mxu0 0.0
    %238 = vmatpush1.msra.mxu0 0.0
    %239 = vmatprep.subr.mxu0 0.0
    %240 = vmatpush1.msra.mxu0 0.0
    %241 = vmatprep.subr.mxu0 0.0
    %242 = vmatpush1.msra.mxu0 0.0
    %243 = vmatprep.subr.mxu0 0.0
    %244 = vmatpush1.msra.mxu0 0.0
    %245 = vmatprep.subr.mxu0 0.0
    %246 = vmatpush1.msra.mxu0 0.0
    %247 = vmatprep.mubr.f32.mxu0 0.0
    %248 = vmatmul.mubr.f32.gmra.mrb[0].mxu0 %v162
    %v249 = vpop.f32.mrb[0].mxu0
    %v250 = vadd.f32 0.0, %v249
    %v251 = vpop.f32.mrb[0].mxu0
    %252 = vmatprep.mubr.f32.mxu0 0.0
    %253 = vmatmul.mubr.f32.gmra.mrb[0].mxu0 %v163
    %v254 = vpop.f32.mrb[0].mxu0
    %v255 = vadd.f32 0.0, %v254
    %v256 = vpop.f32.mrb[0].mxu0
    %257 = vmatprep.mubr.f32.mxu0 0.0
    %258 = vmatmul.mubr.f32.gmra.mrb[0].mxu0 %v164
    %v259 = vpop.f32.mrb[0].mxu0
    %v260 = vadd.f32 0.0, %v259
    %v261 = vpop.f32.mrb[0].mxu0
    %262 = vmatprep.mubr.f32.mxu0 0.0
    %263 = vmatmul.mubr.f32.gmra.mrb[0].mxu0 %v165
    %v264 = vpop.f32.mrb[0].mxu0
    %v265 = vadd.f32 0.0, %v264
    %v266 = vpop.f32.mrb[0].mxu0
    %267 = vmatprep.mubr.f32.mxu0 0.0
    %268 = vmatmul.mubr.f32.gmra.mrb[0].mxu0 %v166
    %v269 = vpop.f32.mrb[0].mxu0
    %v270 = vadd.f32 0.0, %v269
    %v271 = vpop.f32.mrb[0].mxu0
    %272 = vdwg.mxu0
    %v273 = vmul.f32 %v250, %v35
    %v274 = vmul.f32 %v255, %v36
    %v275 = vmul.f32 %v260, %v37
    %v276 = vmul.f32 %v265, %v38
    %v277 = vmul.f32 %v270, %v39
    %v278 = vadd.f32 %v273, %v41
    %v279 = vadd.f32 %v274, %v42
    %v280 = vadd.f32 %v275, %v43
    %v281 = vadd.f32 %v276, %v44
    %v282 = vadd.f32 %v277, %v45
    %v283 = vmax.f32 %v278, 0.0
    %v284 = vmax.f32 %v279, 0.0
    %v285 = vmax.f32 %v280, 0.0
    %v286 = vmax.f32 %v281, 0.0
    %v287 = vmax.f32 %v282, 0.0
    %v288 = vadd.f32 %v18, %v283
    %v289 = vadd.f32 %v19, %v284
    %v290 = vadd.f32 %v20, %v285
    %v291 = vadd.f32 %v21, %v286
    %v292 = vadd.f32 %v22, %v287
    %293 = vst [vmem:[#allocation2] sm:$0xff] %v288
    %294 = vst [vmem:[#allocation2 + $0x8] sm:$0xff] %v289
    %295 = vst [vmem:[#allocation2 + $0x10] sm:$0xff] %v290
    %296 = vst [vmem:[#allocation2 + $0x18] sm:$0xff] %v291
    %297 = vst [vmem:[#allocation2 + $0x20] sm:$0xff] %v292
    // Predicated region
    $region18: #{linear_pw_forward.1} parent=1 // pred_check
      _
    $region19: #{linear_pw_forward.1} parent=1 // pred_check_branch
      %299 = sbr.rel (0) target = $region21
    $region20: #{linear_pw_forward.1} parent=1 // pred_region
      %s301 = ssub.s32 640, 640
      %302 = vsyncadd [#allocation3], %s301
      %s303 = sshll.u32 [#allocation2], 4
      %s304 = int_to_ptr.vmem [resolvable:$true] %s303
      %309 = dma.vmem_to_hbm [thread:$0]  %s304, 640, %s4, [#allocation3], 128, 128, 8
    $region21: #{linear_pw_forward.1} parent=1 // pred_fallthru
      _
    // Predicated region
    $region22: #{linear_pw_forward.1} parent=1 // pred_check
      _
    $region23: #{linear_pw_forward.1} parent=1 // pred_check_branch
      %311 = sbr.rel (0) target = $region25
    $region24: #{linear_pw_forward.1} parent=1 // pred_region
      %312 = dma.done [#allocation3], 640
    $region25: #{linear_pw_forward.1} parent=1 // pred_fallthru
      _
    %313 = vsyncpa [#allocation3], 1

</llo_original>
